<compile_context>
chip_gen: v7x
topology: tpu7x:2x2x1
jax: 0.10.0
libtpu: 0.0.40
codegen_flags: <defaults>
</compile_context>

<pallas_src>
import jax
import jax.numpy as jnp
from jax import lax
from jax.experimental import pallas as pl
from jax.experimental.pallas import tpu as pltpu


# ---------------------------------------------------------------------------
# Kernels
# ---------------------------------------------------------------------------

def _accumulate_y(a_ref, x_ref, acc_ref):
    """acc[c, n] += sum_m x[b, c, m] * A[b, n, m] for the current m-tile.

    a_ref : (1, TN, TM)                     A[b, n-tile, m-tile]
    x_ref : (1, C, TM) streamed per m-tile, or (1, K, C, TM) batch-resident
    acc   : (C, TN) f32 running y tile
    """
    k = pl.program_id(2)

    @pl.when(k == 0)
    def _():
        acc_ref[...] = jnp.zeros_like(acc_ref)

    if x_ref.ndim == 4:            # x batch-resident, laid out (1, K, C, TM)
        x_tile = x_ref[0, k]       # (C, TM) chunk for this contraction step
    else:                          # x streamed per m-tile (or single m-tile)
        x_tile = x_ref[0]          # (C, TM)

    # y[c, n] += sum_m x[c, m] * A[n, m]  -- contract the last dims of both
    # (flash-attention-style q @ k^T matmul; result is already lane-dense
    #  along n, matching the (C_out, N) output layout).
    acc_ref[...] += lax.dot_general(
        x_tile, a_ref[0],
        dimension_numbers=(((1,), (1,)), ((), ())),
        preferred_element_type=jnp.float32)


def _gcn_kernel_project(a_ref, x_ref, w_ref, o_ref, acc_ref):
    """Variant with the 1x1-conv projection fused in the epilogue (C_out >= C_in)."""
    _accumulate_y(a_ref, x_ref, acc_ref)

    @pl.when(pl.program_id(2) == pl.num_programs(2) - 1)
    def _():
        out = jnp.dot(w_ref[...], acc_ref[...], preferred_element_type=jnp.float32)
        o_ref[0] = out.astype(o_ref.dtype)


def _gcn_kernel_prefolded(a_ref, x_ref, o_ref, acc_ref):
    """Variant where W was pre-folded into x in the wrapper (C_out < C_in)."""
    _accumulate_y(a_ref, x_ref, acc_ref)

    @pl.when(pl.program_id(2) == pl.num_programs(2) - 1)
    def _():
        o_ref[0] = acc_ref[...].astype(o_ref.dtype)


# ---------------------------------------------------------------------------
# Wrapper
# ---------------------------------------------------------------------------

def _round_up(n, m):
    return -(-n // m) * m


def _pick_tile(n, target):
    """Largest multiple of 128 that is <= target and divides n; full n otherwise."""
    if n % 128 != 0:
        return n                      # full-dim block (always a legal block shape)
    t = min(max(target, 128), n)
    t -= t % 128
    while t > 128 and n % t != 0:
        t -= 128
    return max(t, 128)


def gcn_no_degree(x, A, weight, *, compute_dtype=jnp.bfloat16, tile=None):
    """GraphConvolution_no_degree forward.

    x      : (B, C_in, N)
    A      : (B, N, N)
    weight : (C_out, C_in) or raw Conv1d weight (C_out, C_in, 1), bias-free
    returns: (B, C_out, N)

    compute_dtype: streaming dtype for the A / x HBM traffic.  bf16 (default)
      halves the HBM bytes of this HBM-bound kernel; accumulation is always
      f32 and W stays f32.  Pass jnp.float32 / None for full-precision streams.
    """
    if weight.ndim == 3:              # raw Conv1d weight (C_out, C_in, 1)
        weight = weight[..., 0]
    B, C_in, N = x.shape
    C_out = weight.shape[0]
    assert A.shape == (B, N, N)
    assert weight.shape == (C_out, C_in)

    out_dtype = x.dtype
    w = weight.astype(jnp.float32)
    stream_dtype = (jnp.dtype(compute_dtype) if compute_dtype is not None
                    else jnp.dtype(out_dtype))

    # When C_out < C_in, folding W into x shrinks the x stream / accumulator
    # and removes the per-tile epilogue matmul. Otherwise keep W in-kernel.
    project = C_out >= C_in
    if project:
        C = C_in
    else:
        x = jnp.einsum("oc,bcm->bom", w, x.astype(jnp.float32))
        C = C_out

    x = x.astype(stream_dtype)
    A = A.astype(stream_dtype)
    isz = jnp.dtype(stream_dtype).itemsize
    osz = jnp.dtype(out_dtype).itemsize

    # N not divisible by 128: small N -> full-dim blocks; large N -> pad so the
    # tiled, bounded-VMEM path is kept on every generation.
    N_pad = N
    if N % 128 != 0 and N > 512:
        N_pad = _round_up(N, 128)
        A = jnp.pad(A, ((0, 0), (0, N_pad - N), (0, N_pad - N)))
        x = jnp.pad(x, ((0, 0), (0, 0), (0, N_pad - N)))

    # Per-core VMEM capacity -> tile / vmem_limit caps (v7x: 64 MiB, v5e/v6e: 128 MiB).
    try:
        vmem_cap = int(pltpu.get_tpu_info().vmem_capacity_bytes)
    except Exception:
        vmem_cap = 64 * 1024 * 1024          # conservative fallback (v7x per-core)
    hard_cap = min(int(vmem_cap * 0.8), 110 * 1024 * 1024)

    # x can be kept VMEM-resident per batch when small (removes the redundant
    # re-fetch of x for every output row-tile).
    x_res_bytes = 2 * _round_up(C, 8) * N_pad * isz      # double-buffered estimate
    x_resident = x_res_bytes <= 8 * 1024 * 1024

    if tile is None:
        tile = 2048 if isz <= 2 else 1024                 # bf16 -> 2048, f32 -> 1024
    t = _pick_tile(N_pad, tile)

    def _estimate(tt):
        return (2 * tt * tt * isz                               # A tile (double-buffered)
                + (x_res_bytes if x_resident else 2 * C * tt * isz)
                + 2 * C_out * tt * osz                          # out tile (double-buffered)
                + C * tt * 4                                    # f32 accumulator
                + (C_out * C_in * 4 if project else 0))         # resident W

    while N_pad % 128 == 0 and t > 128 and _estimate(t) > hard_cap:
        t = _pick_tile(N_pad, t - 128)
    tn = tm = t
    vmem_limit = int(min(max(int(1.5 * _estimate(t)), 32 * 1024 * 1024), hard_cap))

    grid = (B, N_pad // tn, N_pad // tm)
    K = N_pad // tm

    if x_resident and K > 1:
        # Resident multi-step: lay x out as (B, K, C, TM) so the kernel picks the
        # k-th contraction chunk with a plain dynamic integer index.
        x_in = x.reshape(B, C, K, tm).transpose(0, 2, 1, 3)
        x_spec = pl.BlockSpec((1, K, C, tm), lambda b, i, k: (b, 0, 0, 0))
    elif x_resident:
        x_in = x
        x_spec = pl.BlockSpec((1, C, N_pad), lambda b, i, k: (b, 0, 0))
    else:
        x_in = x
        x_spec = pl.BlockSpec((1, C, tm), lambda b, i, k: (b, 0, k))

    in_specs = [
        pl.BlockSpec((1, tn, tm), lambda b, i, k: (b, i, k)),   # A tile
        x_spec,                                                 # x
    ]
    operands = [A, x_in]
    if project:
        in_specs.append(pl.BlockSpec((C_out, C_in), lambda b, i, k: (0, 0)))  # W (resident)
        operands.append(w)
        kernel = _gcn_kernel_project
    else:
        kernel = _gcn_kernel_prefolded

    flops = 2 * B * N_pad * N_pad * C + (2 * B * C_out * C_in * N_pad if project else 0)
    bytes_accessed = (A.size * isz + x.size * isz
                      + B * C_out * N_pad * osz
                      + (C_out * C_in * 4 if project else 0))
    cost = pl.CostEstimate(flops=flops, transcendentals=0,
                           bytes_accessed=bytes_accessed)

    out = pl.pallas_call(
        kernel,
        out_shape=jax.ShapeDtypeStruct((B, C_out, N_pad), out_dtype),
        grid_spec=pltpu.PrefetchScalarGridSpec(
            num_scalar_prefetch=0,
            grid=grid,
            in_specs=in_specs,
            out_specs=pl.BlockSpec((1, C_out, tn), lambda b, i, k: (b, 0, i)),
            scratch_shapes=[pltpu.VMEM((C, tn), jnp.float32)],
        ),
        compiler_params=pltpu.CompilerParams(
            dimension_semantics=("parallel", "parallel", "arbitrary"),
            vmem_limit_bytes=vmem_limit,
        ),
        cost_estimate=cost,
    )(*operands)

    if N_pad != N:
        out = out[..., :N]
    return out


# ---------------------------------------------------------------------------
# Demo / self-test
# ---------------------------------------------------------------------------

if __name__ == "__main__":
    key = jax.random.PRNGKey(0)

    # Case 1: C_out >= C_in (fused in-kernel W projection), tiny demo shapes.
    B, C_in, C_out, N = 2, 8, 32, 16
    k1, k2, k3, key = jax.random.split(key, 4)
    x = jax.random.normal(k1, (B, C_in, N), dtype=jnp.float32)
    A = jax.random.normal(k2, (B, N, N), dtype=jnp.float32)
    weight = jax.random.normal(k3, (C_out, C_in), dtype=jnp.float32) * 0.1

    # reference (same math as the PyTorch module)
    ref = jnp.einsum("oc,bnm,bcm->bon", weight, A, x)

    out_f32 = jax.block_until_ready(
        gcn_no_degree(x, A, weight, compute_dtype=jnp.float32))
    assert out_f32.shape == (B, C_out, N)
    assert jnp.allclose(out_f32, ref, atol=2e-2, rtol=2e-2), \
        float(jnp.max(jnp.abs(out_f32 - ref)))

    out_bf16 = jax.block_until_ready(gcn_no_degree(x, A, weight))  # bf16 streams (default)
    assert out_bf16.shape == (B, C_out, N)
    assert jnp.allclose(out_bf16, ref, atol=0.1, rtol=0.1), \
        float(jnp.max(jnp.abs(out_bf16 - ref)))

    # Case 2: C_out < C_in (W pre-folded into x), forced small tile so the
    # k-accumulation loop and the resident-x dynamic chunk index are exercised.
    B2, C_in2, C_out2, N2 = 1, 32, 8, 256
    k1, k2, k3, key = jax.random.split(key, 4)
    x2 = jax.random.normal(k1, (B2, C_in2, N2), dtype=jnp.float32)
    A2 = jax.random.normal(k2, (B2, N2, N2), dtype=jnp.float32)
    w2 = jax.random.normal(k3, (C_out2, C_in2), dtype=jnp.float32) * 0.1

    ref2 = jnp.einsum("oc,bnm,bcm->bon", w2, A2, x2)
    out2 = jax.block_until_ready(gcn_no_degree(x2, A2, w2, tile=128))
    assert out2.shape == (B2, C_out2, N2)
    assert jnp.allclose(out2, ref2, atol=0.5, rtol=0.05), \
        float(jnp.max(jnp.abs(out2 - ref2)))

    print("KERNEL_OK")
</pallas_src>

<mosaic_0001>
module attributes {stable_mosaic.version = 11 : i64} {
  func.func @_gcn_kernel_project(%arg0: i32, %arg1: i32, %arg2: i32, %arg3: memref<1x16x16xf32, #tpu.memory_space<vmem>>, %arg4: memref<1x8x16xf32, #tpu.memory_space<vmem>>, %arg5: memref<32x8xf32, #tpu.memory_space<vmem>>, %arg6: memref<1x32x16xf32, #tpu.memory_space<vmem>>, %arg7: memref<8x16xf32, #tpu.memory_space<vmem>>) attributes {dimension_semantics = [#tpu.dimension_semantics<parallel>, #tpu.dimension_semantics<parallel>, #tpu.dimension_semantics<arbitrary>], iteration_bounds = array<i64: 2, 1, 1>, scalar_prefetch = 0 : i64, scratch_operands = 1 : i64, tpu.core_type = #tpu.core_type<tc>, window_params = [{transform_indices = @transform_0, window_bounds = array<i64: 1, 16, 16>}, {transform_indices = @transform_1, window_bounds = array<i64: 1, 8, 16>}, {pipeline_mode = #tpu.pipeline_mode<synchronous>, transform_indices = @transform_2, window_bounds = array<i64: 32, 8>}, {transform_indices = @transform_3, window_bounds = array<i64: 1, 32, 16>}]} {
    %c0_i32 = arith.constant 0 : i32
    %0 = arith.cmpi eq, %arg2, %c0_i32 : i32
    %1 = arith.extui %0 : i1 to i32
    %c0_i32_0 = arith.constant 0 : i32
    %2 = arith.cmpi ne, %1, %c0_i32_0 : i32
    scf.if %2 {
      %cst_12 = arith.constant 0.000000e+00 : f32
      %14 = vector.broadcast %cst_12 : f32 to vector<8x16xf32>
      %c0_13 = arith.constant 0 : index
      %c0_14 = arith.constant 0 : index
      %15 = vector.load %arg7[%c0_13, %c0_14] : memref<8x16xf32, #tpu.memory_space<vmem>>, vector<8x16xf32>
      tpu.vector_store %arg7[%c0_13, %c0_14], %14 {strides = array<i32>} : memref<8x16xf32, #tpu.memory_space<vmem>>, vector<8x16xf32>,
    } else {
    }
    %c0 = arith.constant 0 : index
    %c0_1 = arith.constant 0 : index
    %c0_2 = arith.constant 0 : index
    %3 = vector.load %arg4[%c0, %c0_1, %c0_2] : memref<1x8x16xf32, #tpu.memory_space<vmem>>, vector<1x8x16xf32>
    %4 = vector.shape_cast %3 : vector<1x8x16xf32> to vector<8x16xf32>
    %c0_3 = arith.constant 0 : index
    %c0_4 = arith.constant 0 : index
    %5 = vector.load %arg7[%c0_3, %c0_4] : memref<8x16xf32, #tpu.memory_space<vmem>>, vector<8x16xf32>
    %c0_5 = arith.constant 0 : index
    %c0_6 = arith.constant 0 : index
    %c0_7 = arith.constant 0 : index
    %6 = vector.load %arg3[%c0_5, %c0_6, %c0_7] : memref<1x16x16xf32, #tpu.memory_space<vmem>>, vector<1x16x16xf32>
    %7 = vector.shape_cast %6 : vector<1x16x16xf32> to vector<16x16xf32>
    %cst = arith.constant dense<0.000000e+00> : vector<8x16xf32>
    %8 = tpu.matmul %4, %7, %cst {dimension_numbers = #tpu.dot_dimension_numbers<[1], [1], [0], [0], [0, 0, 1, 0], [], []>} : vector<8x16xf32>, vector<16x16xf32>, vector<8x16xf32> -> vector<8x16xf32>
    %9 = arith.addf %5, %8 : vector<8x16xf32>
    %c0_8 = arith.constant 0 : index
    %c0_9 = arith.constant 0 : index
    %10 = vector.load %arg7[%c0_8, %c0_9] : memref<8x16xf32, #tpu.memory_space<vmem>>, vector<8x16xf32>
    tpu.vector_store %arg7[%c0_8, %c0_9], %9 {strides = array<i32>} : memref<8x16xf32, #tpu.memory_space<vmem>>, vector<8x16xf32>,
    %c0_i32_10 = arith.constant 0 : i32
    %11 = arith.cmpi eq, %arg2, %c0_i32_10 : i32
    %12 = arith.extui %11 : i1 to i32
    %c0_i32_11 = arith.constant 0 : i32
    %13 = arith.cmpi ne, %12, %c0_i32_11 : i32
    scf.if %13 {
      %c0_12 = arith.constant 0 : index
      %c0_13 = arith.constant 0 : index
      %14 = vector.load %arg5[%c0_12, %c0_13] : memref<32x8xf32, #tpu.memory_space<vmem>>, vector<32x8xf32>
      %c0_14 = arith.constant 0 : index
      %c0_15 = arith.constant 0 : index
      %15 = vector.load %arg7[%c0_14, %c0_15] : memref<8x16xf32, #tpu.memory_space<vmem>>, vector<8x16xf32>
      %cst_16 = arith.constant dense<0.000000e+00> : vector<32x16xf32>
      %16 = tpu.matmul %14, %15, %cst_16 {dimension_numbers = #tpu.dot_dimension_numbers<[1], [0], [0], [1], [0, 0, 1, 1], [], []>} : vector<32x8xf32>, vector<8x16xf32>, vector<32x16xf32> -> vector<32x16xf32>
      %c0_17 = arith.constant 0 : index
      %c0_18 = arith.constant 0 : index
      %c0_19 = arith.constant 0 : index
      %17 = vector.load %arg6[%c0_17, %c0_18, %c0_19] : memref<1x32x16xf32, #tpu.memory_space<vmem>>, vector<1x32x16xf32>
      %18 = vector.shape_cast %17 : vector<1x32x16xf32> to vector<32x16xf32>
      %19 = vector.shape_cast %16 : vector<32x16xf32> to vector<1x32x16xf32>
      tpu.vector_store %arg6[%c0_17, %c0_18, %c0_19], %19 {strides = array<i32>} : memref<1x32x16xf32, #tpu.memory_space<vmem>>, vector<1x32x16xf32>,
    } else {
    }
    return
  }
  func.func @transform_0(%arg0: i32, %arg1: i32, %arg2: i32) -> (i32, i32, i32) {
    %c0_i32 = arith.constant 0 : i32
    return %arg0, %arg1, %arg2 : i32, i32, i32
  }
  func.func @transform_1(%arg0: i32, %arg1: i32, %arg2: i32) -> (i32, i32, i32) {
    %c0_i32 = arith.constant 0 : i32
    %c0_i32_0 = arith.constant 0 : i32
    %c0_i32_1 = arith.constant 0 : i32
    return %arg0, %c0_i32, %c0_i32_0 : i32, i32, i32
  }
  func.func @transform_2(%arg0: i32, %arg1: i32, %arg2: i32) -> (i32, i32) {
    %c0_i32 = arith.constant 0 : i32
    %c0_i32_0 = arith.constant 0 : i32
    %c0_i32_1 = arith.constant 0 : i32
    return %c0_i32, %c0_i32_0 : i32, i32
  }
  func.func @transform_3(%arg0: i32, %arg1: i32, %arg2: i32) -> (i32, i32, i32) {
    %c0_i32 = arith.constant 0 : i32
    %c0_i32_0 = arith.constant 0 : i32
    return %arg0, %c0_i32, %arg1 : i32, i32, i32
  }
}

</mosaic_0001>

<llo_original>
// kernel: tpu_custom_call.1
$region0: #{tpu_custom_call.1}
  #allocation0 [shape = 'u32[]', space=smem, size = 0x4, offset = 0x4, fixed_abs, tag = 'smem constant byte address 0x4 - core index']
  #allocation1 [shape = 'u32[144,128]{1,0:T(1,128)}', space=vmem, size = 0x12000, scoped, tag = 'internal scratch']
  #allocation2 [shape = 'f32[8,16]{1,0:T(8,128)}', space=vmem, size = 0x1000, scoped, tag = 'scratch operand']
  %s0 = inlined_call_operand.vmem [shape: f32[2,16,16], index: 0, kind: input, shape index: {}]
  %s1 = inlined_call_operand.hbm [shape: f32[2,8,16], index: 1, kind: input, shape index: {}]
  %s2 = inlined_call_operand.vmem [shape: f32[32,8], index: 2, kind: input, shape index: {}]
  %s3 = inlined_call_operand.vmem [shape: f32[2,32,16], index: 3, kind: output, shape index: {}]
  %s4 = sld [smem:[#allocation0]]
  $region57: #{tpu_custom_call.1} parent=0
    _
  %s6 = ssub.s32 1, %s4
  %s7 = scalar_select 0, %s6, %s4
  $region1: #{tpu_custom_call.1} parent=0
    #allocation3 [shape = 'u8[8192]{0}', space=vmem, size = 0x2000, scoped, tag = 'input window, operand 1']
    #allocation4 [shape = 's32[2]{0}', space=sflag, size = 0x8, scoped, tag = 'scoped memory for tpu_custom_call.1']
    %8 = vsyncpa [#allocation4], 0
    %s9 = scalar_lea.sflag [#allocation4], 1
    %10 = vsyncpa %s9, 0
    loop: start=0, step=1, limit=4
    $region2: #{tpu_custom_call.1} parent=1 // loop_pre_header
      _
    $region3: #{tpu_custom_call.1} parent=1 // loop_header
      %s12 = sphi 0, %s16
      %p13 = scmp.ge.s32.totalorder %s12, 4
      %s19 = sphi 0, %s38
      %s20 = sphi 0, %s34
      %s21 = sphi 0, %s30
      %s22 = sphi 0, %s19
      %s23 = sphi 0, %s20
      %s24 = sphi 0, %s21
      %s25 = sphi 0, %s22
      %s26 = sphi 0, %s23
      %s27 = sphi 0, %s24
      %s45 = sphi 0, %s47
      %s48 = sphi 0, %s45
      %s49 = sphi 0, %s48
      %s65 = sphi 0, %s49
      %s71 = sphi 0, %s73
      %s74 = sphi 0, %s71
      %s75 = sphi 0, %s74
      %s91 = sphi 0, %s75
      %s95 = sphi 0, %s95
      %s97 = sphi 0, %s95
      %s98 = sphi 0, %s97
      %s112 = sphi 0, %s98
      %s120 = sphi 0, %s122
      %s123 = sphi 0, %s120
      %s124 = sphi 0, %s123
      %s140 = sphi 0, %s124
    $region4: #{tpu_custom_call.1} parent=1 // loop_header_branch
      %15 = sbr.rel (%p13) target = $region8
    $region5: #{tpu_custom_call.1} parent=1 // loop_body
      %s17 = ssub.s32 %s12, 1
      %s18 = ssub.s32 %s12, 2
      %s28 = sadd.s32 1, %s21
      %p29 = scmp.ge.s32.totalorder %s28, 1
      %s30 = scalar_select %p29, 0, %s28
      %s31 = sadd.s32 1, %s20
      %s32 = scalar_select %p29, %s31, %s20
      %p33 = scmp.ge.s32.totalorder %s32, 1
      %s34 = scalar_select %p33, 0, %s32
      %s35 = sadd.s32 1, %s19
      %s36 = scalar_select %p33, %s35, %s19
      %p37 = scmp.ge.s32.totalorder %s36, 2
      %s38 = scalar_select %p37, 0, %s36
      %s39 = ssub.s32 %s19, %s38
      %s40 = ssub.s32 %s20, %s34
      %s41 = sor.u32 %s39, %s40
      %s42 = ssub.s32 %s21, %s30
      %s43 = sor.u32 %s41, %s42
      %p44 = scmp.eq.s32.totalorder %s43, 0
      %s46 = sadd.s32 %s45, 1
      %s47 = scalar_select %p44, %s45, %s46
      %p50 = pneg %p44
      %p51 = scmp.eq.s32.totalorder %s12, 1
      %p52 = por %p50, %p51
      %p53 = scmp.ne.s32.totalorder %s45, %s48
      %p54 = scmp.eq.s32.totalorder %s12, 0
      %p55 = por %p53, %p54
      %p56 = scmp.ne.s32.totalorder %s45, %s48
      %p57 = scmp.eq.s32.totalorder %s17, 1
      %p58 = por %p56, %p57
      %p59 = scmp.ne.s32.totalorder %s48, %s49
      %p60 = scmp.eq.s32.totalorder %s17, 0
      %p61 = por %p59, %p60
      %p62 = scmp.ne.s32.totalorder %s48, %s49
      %p63 = scmp.eq.s32.totalorder %s18, 1
      %p64 = por %p62, %p63
      %p66 = scmp.ne.s32.totalorder %s49, %s65
      %p67 = scmp.eq.s32.totalorder %s18, 0
      %p68 = por %p66, %p67
      %s69 = ssub.s32 %s19, %s38
      %p70 = scmp.eq.s32.totalorder %s69, 0
      %s72 = sadd.s32 %s71, 1
      %s73 = scalar_select %p70, %s71, %s72
      %p76 = pneg %p70
      %p77 = scmp.eq.s32.totalorder %s12, 1
      %p78 = por %p76, %p77
      %p79 = scmp.ne.s32.totalorder %s71, %s74
      %p80 = scmp.eq.s32.totalorder %s12, 0
      %p81 = por %p79, %p80
      %p82 = scmp.ne.s32.totalorder %s71, %s74
      %p83 = scmp.eq.s32.totalorder %s17, 1
      %p84 = por %p82, %p83
      %p85 = scmp.ne.s32.totalorder %s74, %s75
      %p86 = scmp.eq.s32.totalorder %s17, 0
      %p87 = por %p85, %p86
      %p88 = scmp.ne.s32.totalorder %s74, %s75
      %p89 = scmp.eq.s32.totalorder %s18, 1
      %p90 = por %p88, %p89
      %p92 = scmp.ne.s32.totalorder %s75, %s91
      %p93 = scmp.eq.s32.totalorder %s18, 0
      %p94 = por %p92, %p93
      %s96 = sadd.s32 %s95, 1
      %p99 = scmp.eq.s32.totalorder %s12, 1
      %p100 = scmp.ne.s32.totalorder %s95, %s97
      %p101 = scmp.eq.s32.totalorder %s12, 0
      %p102 = por %p100, %p101
      %p103 = scmp.ne.s32.totalorder %s95, %s97
      %p104 = scmp.eq.s32.totalorder %s17, 1
      %p105 = por %p103, %p104
      %p106 = scmp.ne.s32.totalorder %s97, %s98
      %p107 = scmp.eq.s32.totalorder %s17, 0
      %p108 = por %p106, %p107
      %p109 = scmp.ne.s32.totalorder %s97, %s98
      %p110 = scmp.eq.s32.totalorder %s18, 1
      %p111 = por %p109, %p110
      %p113 = scmp.ne.s32.totalorder %s98, %s112
      %p114 = scmp.eq.s32.totalorder %s18, 0
      %p115 = por %p113, %p114
      %s116 = ssub.s32 %s19, %s38
      %s117 = ssub.s32 %s20, %s34
      %s118 = sor.u32 %s116, %s117
      %p119 = scmp.eq.s32.totalorder %s118, 0
      %s121 = sadd.s32 %s120, 1
      %s122 = scalar_select %p119, %s120, %s121
      %p125 = pneg %p119
      %p126 = scmp.eq.s32.totalorder %s12, 1
      %p127 = por %p125, %p126
      %p128 = scmp.ne.s32.totalorder %s120, %s123
      %p129 = scmp.eq.s32.totalorder %s12, 0
      %p130 = por %p128, %p129
      %p131 = scmp.ne.s32.totalorder %s120, %s123
      %p132 = scmp.eq.s32.totalorder %s17, 1
      %p133 = por %p131, %p132
      %p134 = scmp.ne.s32.totalorder %s123, %s124
      %p135 = scmp.eq.s32.totalorder %s17, 0
      %p136 = por %p134, %p135
      %p137 = scmp.ne.s32.totalorder %s123, %s124
      %p138 = scmp.eq.s32.totalorder %s18, 1
      %p139 = por %p137, %p138
      %p141 = scmp.ne.s32.totalorder %s124, %s140
      %p142 = scmp.eq.s32.totalorder %s18, 0
      %p143 = por %p141, %p142
      %p144 = scmp.le.s32.totalorder 1, %s12
      %p145 = scmp.lt.s32.totalorder %s12, 3
      %p146 = pnand %p144, %p145
      %p147 = pneg %p146
      // Predicated region
      $region9: #{tpu_custom_call.1} parent=5 // pred_check
        _
      $region10: #{tpu_custom_call.1} parent=5 // pred_check_branch
        %149 = sbr.rel (%p146) target = $region12
      $region11: #{tpu_custom_call.1} parent=5 // pred_region
        %s150 = ssub.s32 %s12, 1
        // Predicated region
        $region13: #{tpu_custom_call.1} parent=11 // pred_check
          %p151 = pneg %p108
        $region14: #{tpu_custom_call.1} parent=11 // pred_check_branch
          %153 = sbr.rel (%p151) target = $region16
        $region15: #{tpu_custom_call.1} parent=11 // pred_region
          _
        $region16: #{tpu_custom_call.1} parent=11 // pred_fallthru
          _
      $region12: #{tpu_custom_call.1} parent=5 // pred_fallthru
        _
      %p154 = scmp.lt.s32.totalorder %s12, 2
      // Predicated region
      $region17: #{tpu_custom_call.1} parent=5 // pred_check
        %p155 = pneg %p154
      $region18: #{tpu_custom_call.1} parent=5 // pred_check_branch
        %157 = sbr.rel (%p155) target = $region20
      $region19: #{tpu_custom_call.1} parent=5 // pred_region
        // Predicated region
        $region21: #{tpu_custom_call.1} parent=19 // pred_check
          %p158 = pneg %p55
        $region22: #{tpu_custom_call.1} parent=19 // pred_check_branch
          %160 = sbr.rel (%p158) target = $region24
        $region23: #{tpu_custom_call.1} parent=19 // pred_region
          %s161 = smul.u32 2, %s20
          %p162 = scmp.lt.s32.totalorder %s19, 1
          %s163 = scalar_select %p162, %s19, 1
          %p164 = scmp.lt.s32.totalorder %s161, 1
          %s165 = scalar_select %p164, %s161, 1
          %p166 = scmp.lt.s32.totalorder %s21, 0
          %s167 = scalar_select %p166, %s21, 0
          %s168 = sadd.s32 %s167, %s165
          %s169 = smul.addr %s163, 2
          %s170 = sadd.s32 %s168, %s169
          %s171 = smul.addr %s170, 8
          %s172 = scalar_lea.vmem %s0, %s171
          %s173 = smul.u32 2, %s20
        $region24: #{tpu_custom_call.1} parent=19 // pred_fallthru
          _
        // Predicated region
        $region25: #{tpu_custom_call.1} parent=19 // pred_check
          %p174 = pneg %p81
        $region26: #{tpu_custom_call.1} parent=19 // pred_check_branch
          %176 = sbr.rel (%p174) target = $region28
        $region27: #{tpu_custom_call.1} parent=19 // pred_region
          %s177 = sand.u32 %s71, 1
          %s178 = scalar_lea.sflag [#allocation4], %s177
          %s179 = sand.u32 %s71, 1
          %s180 = smul.addr %s179, 8
          %s181 = scalar_lea.vmem [#allocation3], %s180
          %s183 = ssub.s32 128, 128
          %184 = vsyncadd %s178, %s183
          %s185 = smul.addr %s19, 128
          %s186 = scalar_lea.hbm %s1, %s185
          %s188 = sshll.u32 %s181, 4
          %s189 = int_to_ptr.vmem [resolvable:$true] %s188
          %191 = dma.hbm_to_vmem [thread:$0]  %s186, 128, %s189, %s178
        $region28: #{tpu_custom_call.1} parent=19 // pred_fallthru
          _
      $region20: #{tpu_custom_call.1} parent=5 // pred_fallthru
        _
      %p192 = scmp.le.s32.totalorder 1, %s12
      %p193 = scmp.lt.s32.totalorder %s12, 3
      %p194 = pnand %p192, %p193
      %p195 = pneg %p194
      // Predicated region
      $region29: #{tpu_custom_call.1} parent=5 // pred_check
        _
      $region30: #{tpu_custom_call.1} parent=5 // pred_check_branch
        %197 = sbr.rel (%p194) target = $region32
      $region31: #{tpu_custom_call.1} parent=5 // pred_region
        %s198 = ssub.s32 %s12, 1
        %s199 = sand.u32 %s74, 1
        %s200 = scalar_lea.sflag [#allocation4], %s199
        %s201 = sand.u32 %s74, 1
        %s202 = smul.addr %s201, 8
        %s203 = scalar_lea.vmem [#allocation3], %s202
        // Predicated region
        $region33: #{tpu_custom_call.1} parent=31 // pred_check
          %p204 = pneg %p87
        $region34: #{tpu_custom_call.1} parent=31 // pred_check_branch
          %206 = sbr.rel (%p204) target = $region36
        $region35: #{tpu_custom_call.1} parent=31 // pred_region
          %207 = dma.done %s200, 128
        $region36: #{tpu_custom_call.1} parent=31 // pred_fallthru
          _
        %s208 = smul.u32 2, %s23
        %p209 = scmp.lt.s32.totalorder %s22, 1
        %s210 = scalar_select %p209, %s22, 1
        %p211 = scmp.lt.s32.totalorder %s208, 1
        %s212 = scalar_select %p211, %s208, 1
        %p213 = scmp.lt.s32.totalorder %s24, 0
        %s214 = scalar_select %p213, %s24, 0
        %s215 = sadd.s32 %s214, %s212
        %s216 = smul.addr %s210, 2
        %s217 = sadd.s32 %s215, %s216
        %s218 = smul.addr %s217, 8
        %s219 = scalar_lea.vmem %s0, %s218
        %p220 = pneg %p61
        %p221 = pneg %p58
        %s222 = sand.u32 %s74, 1
        %s223 = scalar_lea.sflag [#allocation4], %s222
        %s224 = sand.u32 %s74, 1
        %s225 = smul.addr %s224, 8
        %s226 = scalar_lea.vmem [#allocation3], %s225
        %p227 = pneg %p87
        %p228 = pneg %p84
        %p229 = pneg %p108
        %p230 = pneg %p105
        %p231 = pneg %p136
        %p232 = pneg %p133
        %p233 = scmp.lt.s32.totalorder %s22, 1
        %s234 = scalar_select %p233, %s22, 1
        %p235 = scmp.lt.s32.totalorder %s23, 0
        %s236 = scalar_select %p235, %s23, 0
        %s237 = smul.addr %s234, 4
        %s238 = sadd.s32 %s236, %s237
        %s239 = smul.addr %s238, 8
        %s240 = scalar_lea.vmem %s3, %s239
        %s241 = smul.u32 2, %s23
        %p242 = scmp.lt.s32.totalorder %s22, 1
        %s243 = scalar_select %p242, %s22, 1
        %p244 = scmp.lt.s32.totalorder %s241, 1
        %s245 = scalar_select %p244, %s241, 1
        %p246 = scmp.lt.s32.totalorder %s24, 0
        %s247 = scalar_select %p246, %s24, 0
        %s248 = sadd.s32 %s247, %s245
        %s249 = smul.addr %s243, 2
        %s250 = sadd.s32 %s248, %s249
        %s251 = smul.addr %s250, 8
        %s252 = scalar_lea.vmem %s0, %s251
        %s253 = smul.u32 2, %s23
        %p254 = scmp.lt.s32.totalorder %s22, 1
        %s255 = scalar_select %p254, %s22, 1
        %p256 = scmp.lt.s32.totalorder %s23, 0
        %s257 = scalar_select %p256, %s23, 0
        %s258 = smul.addr %s255, 4
        %s259 = sadd.s32 %s257, %s258
        %s260 = smul.addr %s259, 8
        %s261 = scalar_lea.vmem %s3, %s260
        %p262 = scmp.eq.s32.totalorder %s24, 0
        // Predicated region
        $region37: #{tpu_custom_call.1} parent=31 // pred_check
          %p263 = pneg %p262
        $region38: #{tpu_custom_call.1} parent=31 // pred_check_branch
          %265 = sbr.rel (%p263) target = $region40
        $region39: #{tpu_custom_call.1} parent=31 // pred_region
          %vm266 = vcmask 130048
          %267 = vst.msk [vmem:[#allocation2] sm:$0xff] %vm266, 0.0
        $region40: #{tpu_custom_call.1} parent=31 // pred_fallthru
          _
        %v268 = vld [vmem:[%s203] sm:$0xff]
        %v269 = vld [vmem:[#allocation2] sm:$0xff]
        %v270 = vld [vmem:[%s252] sm:$0xff]
        %v271 = vld [vmem:[%s252 + $0x8] sm:$0xff]
        %vm272 = vcmask 130048
        %v274 = vsel %vm272, %v268, 0
        %v277 = vsel %vm272, %v270, 0
        %v280 = vsel %vm272, %v271, 0
        %282 = vmatprep.subr.mxu0 0.0
        %283 = vmatpush1.xpose.msra.mxu0 %v277
        %284 = vmatprep.subr.mxu0 0.0
        %285 = vmatpush1.xpose.msra.mxu0 %v280
        %286 = vmatprep.subr.mxu0 0.0
        %287 = vmatpush1.xpose.msra.mxu0 0.0
        %288 = vmatprep.subr.mxu0 0.0
        %289 = vmatpush1.xpose.msra.mxu0 0.0
        %290 = vmatprep.subr.mxu0 0.0
        %291 = vmatpush1.xpose.msra.mxu0 0.0
        %292 = vmatprep.subr.mxu0 0.0
        %293 = vmatpush1.xpose.msra.mxu0 0.0
        %294 = vmatprep.subr.mxu0 0.0
        %295 = vmatpush1.xpose.msra.mxu0 0.0
        %296 = vmatprep.subr.mxu0 0.0
        %297 = vmatpush1.xpose.msra.mxu0 0.0
        %298 = vmatprep.subr.mxu0 0.0
        %299 = vmatpush1.xpose.msra.mxu0 0.0
        %300 = vmatprep.subr.mxu0 0.0
        %301 = vmatpush1.xpose.msra.mxu0 0.0
        %302 = vmatprep.subr.mxu0 0.0
        %303 = vmatpush1.xpose.msra.mxu0 0.0
        %304 = vmatprep.subr.mxu0 0.0
        %305 = vmatpush1.xpose.msra.mxu0 0.0
        %306 = vmatprep.subr.mxu0 0.0
        %307 = vmatpush1.xpose.msra.mxu0 0.0
        %308 = vmatprep.subr.mxu0 0.0
        %309 = vmatpush1.xpose.msra.mxu0 0.0
        %310 = vmatprep.subr.mxu0 0.0
        %311 = vmatpush1.xpose.msra.mxu0 0.0
        %312 = vmatprep.subr.mxu0 0.0
        %313 = vmatpush1.xpose.msra.mxu0 0.0
        %314 = vmatprep.subr.mxu0 0.0
        %315 = vmatpush1.xpose.msra.mxu0 0.0
        %316 = vmatprep.subr.mxu0 0.0
        %317 = vmatpush1.xpose.msra.mxu0 0.0
        %318 = vmatprep.subr.mxu0 0.0
        %319 = vmatpush1.xpose.msra.mxu0 0.0
        %320 = vmatprep.subr.mxu0 0.0
        %321 = vmatpush1.xpose.msra.mxu0 0.0
        %322 = vmatprep.subr.mxu0 0.0
        %323 = vmatpush1.xpose.msra.mxu0 0.0
        %324 = vmatprep.subr.mxu0 0.0
        %325 = vmatpush1.xpose.msra.mxu0 0.0
        %326 = vmatprep.subr.mxu0 0.0
        %327 = vmatpush1.xpose.msra.mxu0 0.0
        %328 = vmatprep.subr.mxu0 0.0
        %329 = vmatpush1.xpose.msra.mxu0 0.0
        %330 = vmatprep.subr.mxu0 0.0
        %331 = vmatpush1.xpose.msra.mxu0 0.0
        %332 = vmatprep.subr.mxu0 0.0
        %333 = vmatpush1.xpose.msra.mxu0 0.0
        %334 = vmatprep.subr.mxu0 0.0
        %335 = vmatpush1.xpose.msra.mxu0 0.0
        %336 = vmatprep.subr.mxu0 0.0
        %337 = vmatpush1.xpose.msra.mxu0 0.0
        %338 = vmatprep.subr.mxu0 0.0
        %339 = vmatpush1.xpose.msra.mxu0 0.0
        %340 = vmatprep.subr.mxu0 0.0
        %341 = vmatpush1.xpose.msra.mxu0 0.0
        %342 = vmatprep.subr.mxu0 0.0
        %343 = vmatpush1.xpose.msra.mxu0 0.0
        %344 = vmatprep.subr.mxu0 0.0
        %345 = vmatpush1.xpose.msra.mxu0 0.0
        %346 = vmatprep.mubr.f32.mxu0 0.0
        %347 = vmatmul.mubr.f32.gmra.mrb[0].mxu0 %v274
        %v348 = vpop.f32.mrb[0].mxu0
        %v349 = vadd.f32 0.0, %v348
        %v350 = vpop.f32.mrb[0].mxu0
        %351 = vdwg.mxu0
        %v352 = vadd.f32 %v269, %v349
        %353 = vst.msk [vmem:[#allocation2] sm:$0xff] %vm272, %v352
        // Predicated region
        $region41: #{tpu_custom_call.1} parent=31 // pred_check
          %p354 = pneg %p262
        $region42: #{tpu_custom_call.1} parent=31 // pred_check_branch
          %356 = sbr.rel (%p354) target = $region44
        $region43: #{tpu_custom_call.1} parent=31 // pred_region
          %v357 = vld [vmem:[%s2] sm:$0xff]
          %v358 = vld [vmem:[%s2 + $0x8] sm:$0xff]
          %v359 = vld [vmem:[%s2 + $0x10] sm:$0xff]
          %v360 = vld [vmem:[%s2 + $0x18] sm:$0xff]
          %v361 = vld [vmem:[#allocation2] sm:$0xff]
          %vm362 = vcmask 64512
          %v364 = vsel %vm362, %v357, 0
          %v367 = vsel %vm362, %v358, 0
          %v370 = vsel %vm362, %v359, 0
          %v373 = vsel %vm362, %v360, 0
          %375 = vmatprep.subr.mxu0 0.0
          %376 = vmatpush1.msra.mxu0 %v361
          %377 = vmatprep.subr.mxu0 0.0
          %378 = vmatpush1.msra.mxu0 0.0
          %379 = vmatprep.subr.mxu0 0.0
          %380 = vmatpush1.msra.mxu0 0.0
          %381 = vmatprep.subr.mxu0 0.0
          %382 = vmatpush1.msra.mxu0 0.0
          %383 = vmatprep.subr.mxu0 0.0
          %384 = vmatpush1.msra.mxu0 0.0
          %385 = vmatprep.subr.mxu0 0.0
          %386 = vmatpush1.msra.mxu0 0.0
          %387 = vmatprep.subr.mxu0 0.0
          %388 = vmatpush1.msra.mxu0 0.0
          %389 = vmatprep.subr.mxu0 0.0
          %390 = vmatpush1.msra.mxu0 0.0
          %391 = vmatprep.subr.mxu0 0.0
          %392 = vmatpush1.msra.mxu0 0.0
          %393 = vmatprep.subr.mxu0 0.0
          %394 = vmatpush1.msra.mxu0 0.0
          %395 = vmatprep.subr.mxu0 0.0
          %396 = vmatpush1.msra.mxu0 0.0
          %397 = vmatprep.subr.mxu0 0.0
          %398 = vmatpush1.msra.mxu0 0.0
          %399 = vmatprep.subr.mxu0 0.0
          %400 = vmatpush1.msra.mxu0 0.0
          %401 = vmatprep.subr.mxu0 0.0
          %402 = vmatpush1.msra.mxu0 0.0
          %403 = vmatprep.subr.mxu0 0.0
          %404 = vmatpush1.msra.mxu0 0.0
          %405 = vmatprep.subr.mxu0 0.0
          %406 = vmatpush1.msra.mxu0 0.0
          %407 = vmatprep.subr.mxu0 0.0
          %408 = vmatpush1.msra.mxu0 0.0
          %409 = vmatprep.subr.mxu0 0.0
          %410 = vmatpush1.msra.mxu0 0.0
          %411 = vmatprep.subr.mxu0 0.0
          %412 = vmatpush1.msra.mxu0 0.0
          %413 = vmatprep.subr.mxu0 0.0
          %414 = vmatpush1.msra.mxu0 0.0
          %415 = vmatprep.subr.mxu0 0.0
          %416 = vmatpush1.msra.mxu0 0.0
          %417 = vmatprep.subr.mxu0 0.0
          %418 = vmatpush1.msra.mxu0 0.0
          %419 = vmatprep.subr.mxu0 0.0
          %420 = vmatpush1.msra.mxu0 0.0
          %421 = vmatprep.subr.mxu0 0.0
          %422 = vmatpush1.msra.mxu0 0.0
          %423 = vmatprep.subr.mxu0 0.0
          %424 = vmatpush1.msra.mxu0 0.0
          %425 = vmatprep.subr.mxu0 0.0
          %426 = vmatpush1.msra.mxu0 0.0
          %427 = vmatprep.subr.mxu0 0.0
          %428 = vmatpush1.msra.mxu0 0.0
          %429 = vmatprep.subr.mxu0 0.0
          %430 = vmatpush1.msra.mxu0 0.0
          %431 = vmatprep.subr.mxu0 0.0
          %432 = vmatpush1.msra.mxu0 0.0
          %433 = vmatprep.subr.mxu0 0.0
          %434 = vmatpush1.msra.mxu0 0.0
          %435 = vmatprep.subr.mxu0 0.0
          %436 = vmatpush1.msra.mxu0 0.0
          %437 = vmatprep.subr.mxu0 0.0
          %438 = vmatpush1.msra.mxu0 0.0
          %439 = vmatprep.mubr.f32.mxu0 0.0
          %440 = vmatmul.mubr.f32.gmra.mrb[0].mxu0 %v364
          %v441 = vpop.f32.mrb[0].mxu0
          %v442 = vadd.f32 0.0, %v441
          %v443 = vpop.f32.mrb[0].mxu0
          %444 = vmatprep.mubr.f32.mxu0 0.0
          %445 = vmatmul.mubr.f32.gmra.mrb[0].mxu0 %v367
          %v446 = vpop.f32.mrb[0].mxu0
          %v447 = vadd.f32 0.0, %v446
          %v448 = vpop.f32.mrb[0].mxu0
          %449 = vmatprep.mubr.f32.mxu0 0.0
          %450 = vmatmul.mubr.f32.gmra.mrb[0].mxu0 %v370
          %v451 = vpop.f32.mrb[0].mxu0
          %v452 = vadd.f32 0.0, %v451
          %v453 = vpop.f32.mrb[0].mxu0
          %454 = vmatprep.mubr.f32.mxu0 0.0
          %455 = vmatmul.mubr.f32.gmra.mrb[0].mxu0 %v373
          %v456 = vpop.f32.mrb[0].mxu0
          %v457 = vadd.f32 0.0, %v456
          %v458 = vpop.f32.mrb[0].mxu0
          %459 = vdwg.mxu0
          %460 = vst.msk [vmem:[%s261] sm:$0xff] %vm272, %v442
          %461 = vst.msk [vmem:[%s261 + $0x8] sm:$0xff] %vm272, %v447
          %462 = vst.msk [vmem:[%s261 + $0x10] sm:$0xff] %vm272, %v452
          %463 = vst.msk [vmem:[%s261 + $0x18] sm:$0xff] %vm272, %v457
        $region44: #{tpu_custom_call.1} parent=31 // pred_fallthru
          _
        %p464 = scmp.lt.s32.totalorder %s22, 1
        %s465 = scalar_select %p464, %s22, 1
        %p466 = scmp.lt.s32.totalorder %s23, 0
        %s467 = scalar_select %p466, %s23, 0
        %s468 = smul.addr %s465, 4
        %s469 = sadd.s32 %s467, %s468
        %s470 = smul.addr %s469, 8
        %s471 = scalar_lea.vmem %s3, %s470
        // Predicated region
        $region45: #{tpu_custom_call.1} parent=31 // pred_check
          %p472 = pneg %p133
        $region46: #{tpu_custom_call.1} parent=31 // pred_check_branch
          %474 = sbr.rel (%p472) target = $region48
        $region47: #{tpu_custom_call.1} parent=31 // pred_region
          _
        $region48: #{tpu_custom_call.1} parent=31 // pred_fallthru
          _
      $region32: #{tpu_custom_call.1} parent=5 // pred_fallthru
        _
      %p475 = scmp.le.s32.totalorder 2, %s12
      // Predicated region
      $region49: #{tpu_custom_call.1} parent=5 // pred_check
        %p476 = pneg %p475
      $region50: #{tpu_custom_call.1} parent=5 // pred_check_branch
        %478 = sbr.rel (%p476) target = $region52
      $region51: #{tpu_custom_call.1} parent=5 // pred_region
        %s479 = ssub.s32 %s12, 2
        // Predicated region
        $region53: #{tpu_custom_call.1} parent=51 // pred_check
          %p480 = pneg %p139
        $region54: #{tpu_custom_call.1} parent=51 // pred_check_branch
          %482 = sbr.rel (%p480) target = $region56
        $region55: #{tpu_custom_call.1} parent=51 // pred_region
          %p483 = scmp.lt.s32.totalorder %s25, 1
          %s484 = scalar_select %p483, %s25, 1
          %p485 = scmp.lt.s32.totalorder %s26, 0
          %s486 = scalar_select %p485, %s26, 0
          %s487 = smul.addr %s484, 4
          %s488 = sadd.s32 %s486, %s487
          %s489 = smul.addr %s488, 8
          %s490 = scalar_lea.vmem %s3, %s489
        $region56: #{tpu_custom_call.1} parent=51 // pred_fallthru
          _
      $region52: #{tpu_custom_call.1} parent=5 // pred_fallthru
        _
    $region6: #{tpu_custom_call.1} parent=1 // loop_footer
      %s16 = sadd.s32 1, %s12
    $region7: #{tpu_custom_call.1} parent=1 // loop_footer_branch
      %11 = sbr.rel target = $region3
    $region8: #{tpu_custom_call.1} parent=1 // loop_exit
      _
    %491 = vsyncpa [#allocation4], 1
    %s492 = scalar_lea.sflag [#allocation4], 1
    %493 = vsyncpa %s492, 1

</llo_original>
